<compile_context>
chip_gen: v7x
topology: tpu7x:2x2x1
jax: 0.10.0
libtpu: 0.0.40
codegen_flags: <defaults>
</compile_context>

<pallas_src>
import jax
import jax.numpy as jnp
from jax.experimental import pallas as pl
from jax.experimental.pallas import tpu as pltpu


def autopad(k, p=None, d=1):
    """Pad to 'same' shape outputs (matches the PyTorch helper)."""
    if d > 1:
        k = d * (k - 1) + 1 if isinstance(k, int) else [d * (x - 1) + 1 for x in k]
    if p is None:
        p = k // 2 if isinstance(k, int) else [x // 2 for x in k]
    return p


def _round_up(x, m):
    return (x + m - 1) // m * m


def _silu_f32(y):
    # y * sigmoid(y); exp and the reciprocal both run on the EUP slot.
    return y * pl.reciprocal(1.0 + jnp.exp(-y), approx=True)


def _gemm_bn_silu_single_kernel(p_ref, w_ref, s_ref, b_ref, o_ref):
    # Single contraction step (K_p == tk): no accumulator scratch needed.
    acc = jnp.dot(p_ref[...], w_ref[...], preferred_element_type=jnp.float32)
    y = acc * s_ref[...] + b_ref[...]            # BN scale/bias in f32 epilogue
    o_ref[...] = _silu_f32(y).astype(o_ref.dtype)


def _gemm_bn_silu_acc_kernel(p_ref, w_ref, s_ref, b_ref, o_ref, acc_ref):
    # p_ref:   (tm, tk)  im2col activation patches (compute dtype)
    # w_ref:   (tk, tn)  conv weights (compute dtype, BN scale NOT folded in)
    # s_ref:   (1,  tn)  BN scale (f32)
    # b_ref:   (1,  tn)  BN bias  (f32)
    # o_ref:   (tm, tn)  output tile
    # acc_ref: (tm, tn)  f32 VMEM accumulator (persists across the K axis)
    k_idx = pl.program_id(2)

    @pl.when(k_idx == 0)
    def _():
        acc_ref[...] = jnp.zeros_like(acc_ref)

    acc_ref[...] += jnp.dot(p_ref[...], w_ref[...],
                            preferred_element_type=jnp.float32)

    @pl.when(k_idx == pl.num_programs(2) - 1)
    def _():
        y = acc_ref[...] * s_ref[...] + b_ref[...]
        o_ref[...] = _silu_f32(y).astype(o_ref.dtype)


def _vmem_params():
    """(working-set budget, vmem_limit_bytes) sized for the local TPU generation."""
    cap = 128 * 1024 * 1024
    try:
        info = pltpu.get_tpu_info()
        cap = int(getattr(info, "vmem_capacity_bytes", cap)) or cap
    except Exception:
        pass
    # 96 MiB limit / 40 MiB working set on 128 MiB parts (v5e/v6e);
    # 48 MiB limit / 24 MiB working set on 64 MiB v7x.
    vmem_limit = int(min(cap * 3 // 4, 96 * 1024 * 1024))
    budget = int(max(min(cap // 2 - 8 * 1024 * 1024, 40 * 1024 * 1024),
                     8 * 1024 * 1024))
    return budget, vmem_limit


def conv_bn_silu(x_nchw, weight_oikk, gamma, beta, run_mean, run_var,
                 *, k=1, stride=1, pad=None, eps=1e-5,
                 compute_dtype=jnp.bfloat16, out_dtype=None):
    """x_nchw: (N, Cin, H, W), weight: (Cout, Cin, k, k). Returns (N, Cout, Ho, Wo)."""
    pad = autopad(k, pad, 1)
    N, Cin, H, W = x_nchw.shape
    Cout = weight_oikk.shape[0]
    Ho = (H + 2 * pad - k) // stride + 1
    Wo = (W + 2 * pad - k) // stride + 1
    if out_dtype is None:
        out_dtype = x_nchw.dtype

    # ---- wrapper-side layout plumbing (plain JAX) ----
    # NCHW -> NHWC, pad, im2col: fold the k*k taps and the stride into the
    # contraction dim so the kernel sees a plain GEMM.
    # TODO(synk): for 3x3 convs this still materializes an M x K patches array
    #             in HBM; an in-kernel tap gather would remove the 9x read amp.
    x_nhwc = jnp.transpose(x_nchw, (0, 2, 3, 1))
    x_pad = jnp.pad(x_nhwc, ((0, 0), (pad, pad), (pad, pad), (0, 0)))
    taps = []
    for kh in range(k):
        for kw in range(k):
            taps.append(x_pad[:, kh:kh + stride * Ho:stride,
                              kw:kw + stride * Wo:stride, :])
    K = k * k * Cin
    M = N * Ho * Wo
    patches = jnp.concatenate(taps, axis=-1).reshape(M, K).astype(compute_dtype)

    # Weights: (Cout, Cin, k, k) -> (k, k, Cin, Cout) -> (K, Cout). BN scale is
    # applied in the f32 epilogue (precision), not folded into bf16 weights.
    w = jnp.transpose(weight_oikk, (2, 3, 1, 0)).reshape(K, Cout).astype(compute_dtype)
    scale = gamma.astype(jnp.float32) / jnp.sqrt(run_var.astype(jnp.float32) + eps)
    bias = beta.astype(jnp.float32) - run_mean.astype(jnp.float32) * scale

    # ---- tiling (generation-aware) ----
    LANE = 128
    budget, vmem_limit = _vmem_params()
    cd = jnp.dtype(compute_dtype).itemsize
    od = jnp.dtype(out_dtype).itemsize

    Cout_p = _round_up(Cout, LANE)                 # lane-dense output stores
    K_p = _round_up(K, LANE)                       # lane-dense patch blocks

    tn = 256 if Cout_p % 256 == 0 else 128
    tk = 128
    for cand in (512, 384, 256, 128):              # fixed, bounded contraction tile
        if cand <= K_p and K_p % cand == 0:
            tk = cand
            break

    def working_set(tm_):
        return (2 * (tm_ * tk + tk * tn) * cd      # double-buffered operand blocks
                + 2 * tm_ * tn * od                # double-buffered output block
                + tm_ * tn * 4                     # f32 accumulator scratch
                + 4 * tn * 4)                      # scale/bias blocks

    if M < 128:
        tm = _round_up(M, 8)
    else:
        tm = 128
        for cand in (512, 384, 256, 128):          # biggest rows tile that fits budget
            if working_set(cand) <= budget:
                tm = cand
                break
        tm = min(tm, _round_up(M, 128))

    # Megacore occupancy (v7x has 2 TensorCores): ensure at least one "parallel"
    # grid axis has >= 2 blocks for all but the tiniest layers.
    if M >= 128 and _round_up(M, tm) // tm == 1 and Cout_p // tn == 1:
        if tm >= 256:
            tm //= 2
        elif tn > 128:
            tn = 128

    M_p = _round_up(M, tm)
    nk = K_p // tk

    patches_p = jnp.pad(patches, ((0, M_p - M), (0, K_p - K)))
    w_p = jnp.pad(w, ((0, K_p - K), (0, Cout_p - Cout)))
    scale_p = jnp.pad(scale.reshape(1, Cout), ((0, 0), (0, Cout_p - Cout)))
    bias_p = jnp.pad(bias.reshape(1, Cout), ((0, 0), (0, Cout_p - Cout)))

    cost = pl.CostEstimate(
        flops=2 * M_p * K_p * Cout_p,
        transcendentals=M_p * Cout_p,
        bytes_accessed=(M_p * K_p * cd + K_p * Cout_p * cd + M_p * Cout_p * od),
    )

    if nk == 1:
        # Scratch-free path: the whole (padded) contraction is one MXU pass.
        out_2d = pl.pallas_call(
            _gemm_bn_silu_single_kernel,
            out_shape=jax.ShapeDtypeStruct((M_p, Cout_p), out_dtype),
            grid_spec=pltpu.PrefetchScalarGridSpec(
                num_scalar_prefetch=0,
                grid=(M_p // tm, Cout_p // tn),
                in_specs=[
                    pl.BlockSpec((tm, tk), lambda i, j: (i, 0)),
                    pl.BlockSpec((tk, tn), lambda i, j: (0, j)),
                    pl.BlockSpec((1, tn), lambda i, j: (0, j)),
                    pl.BlockSpec((1, tn), lambda i, j: (0, j)),
                ],
                out_specs=pl.BlockSpec((tm, tn), lambda i, j: (i, j)),
            ),
            compiler_params=pltpu.CompilerParams(
                dimension_semantics=("parallel", "parallel"),
                vmem_limit_bytes=vmem_limit,
            ),
            cost_estimate=cost,
        )(patches_p, w_p, scale_p, bias_p)
    else:
        out_2d = pl.pallas_call(
            _gemm_bn_silu_acc_kernel,
            out_shape=jax.ShapeDtypeStruct((M_p, Cout_p), out_dtype),
            grid_spec=pltpu.PrefetchScalarGridSpec(
                num_scalar_prefetch=0,
                grid=(M_p // tm, Cout_p // tn, nk),
                in_specs=[
                    pl.BlockSpec((tm, tk), lambda i, j, kk: (i, kk)),
                    pl.BlockSpec((tk, tn), lambda i, j, kk: (kk, j)),
                    pl.BlockSpec((1, tn), lambda i, j, kk: (0, j)),
                    pl.BlockSpec((1, tn), lambda i, j, kk: (0, j)),
                ],
                out_specs=pl.BlockSpec((tm, tn), lambda i, j, kk: (i, j)),
                scratch_shapes=[pltpu.VMEM((tm, tn), jnp.float32)],
            ),
            compiler_params=pltpu.CompilerParams(
                dimension_semantics=("parallel", "parallel", "arbitrary"),
                vmem_limit_bytes=vmem_limit,
            ),
            cost_estimate=cost,
        )(patches_p, w_p, scale_p, bias_p)

    out = out_2d[:M, :Cout].reshape(N, Ho, Wo, Cout)
    return jnp.transpose(out, (0, 3, 1, 2))  # back to NCHW


def _reference(x_nchw, weight, gamma, beta, run_mean, run_var, *, k, stride, eps=1e-5):
    pad = autopad(k, None, 1)
    y = jax.lax.conv_general_dilated(
        x_nchw.astype(jnp.float32), weight.astype(jnp.float32),
        window_strides=(stride, stride),
        padding=[(pad, pad), (pad, pad)],
        dimension_numbers=("NCHW", "OIHW", "NCHW"))
    scale = gamma / jnp.sqrt(run_var + eps)
    bias = beta - run_mean * scale
    y = y * scale[None, :, None, None] + bias[None, :, None, None]
    return y * jax.nn.sigmoid(y)


if __name__ == "__main__":
    key = jax.random.PRNGKey(0)
    keys = jax.random.split(key, 12)

    # ---- Test 1: 3x3, stride 1, f32 operand path (tight-ish check) ----
    N, Cin, H, W = 2, 4, 16, 16
    Cout, K, S = 8, 3, 1
    x = jax.random.normal(keys[0], (N, Cin, H, W), jnp.float32)
    weight = jax.random.normal(keys[1], (Cout, Cin, K, K), jnp.float32) * 0.1
    gamma = 1.0 + 0.1 * jax.random.normal(keys[2], (Cout,), jnp.float32)
    beta = 0.1 * jax.random.normal(keys[3], (Cout,), jnp.float32)
    run_mean = 0.05 * jax.random.normal(keys[4], (Cout,), jnp.float32)
    run_var = 1.0 + 0.1 * jnp.abs(jax.random.normal(keys[5], (Cout,), jnp.float32))

    ref = _reference(x, weight, gamma, beta, run_mean, run_var, k=K, stride=S)

    out = conv_bn_silu(x, weight, gamma, beta, run_mean, run_var,
                       k=K, stride=S, compute_dtype=jnp.float32)
    out = jax.block_until_ready(out)
    assert out.shape == (N, Cout, H, W), out.shape
    assert jnp.allclose(out, ref, atol=5e-3, rtol=5e-3), \
        float(jnp.max(jnp.abs(out - ref)))

    # ---- Test 2: default bf16 operand path (MXU-native), loose tolerance ----
    out_bf16 = conv_bn_silu(x, weight, gamma, beta, run_mean, run_var, k=K, stride=S)
    out_bf16 = jax.block_until_ready(out_bf16)
    assert jnp.allclose(out_bf16, ref, atol=1e-1, rtol=1e-1), \
        float(jnp.max(jnp.abs(out_bf16 - ref)))

    # ---- Test 3: stride-2 downsampling Conv (stride handled in wrapper im2col) ----
    out_s2 = conv_bn_silu(x, weight, gamma, beta, run_mean, run_var,
                          k=K, stride=2, compute_dtype=jnp.float32)
    out_s2 = jax.block_until_ready(out_s2)
    ref_s2 = _reference(x, weight, gamma, beta, run_mean, run_var, k=K, stride=2)
    assert out_s2.shape == ref_s2.shape, (out_s2.shape, ref_s2.shape)
    assert jnp.allclose(out_s2, ref_s2, atol=5e-3, rtol=5e-3), \
        float(jnp.max(jnp.abs(out_s2 - ref_s2)))

    # ---- Test 4: 1x1 pointwise Conv ----
    Cout1 = 16
    w1 = jax.random.normal(keys[6], (Cout1, Cin, 1, 1), jnp.float32) * 0.3
    g1 = 1.0 + 0.1 * jax.random.normal(keys[7], (Cout1,), jnp.float32)
    b1 = 0.1 * jax.random.normal(keys[8], (Cout1,), jnp.float32)
    m1 = 0.05 * jax.random.normal(keys[9], (Cout1,), jnp.float32)
    v1 = 1.0 + 0.1 * jnp.abs(jax.random.normal(keys[10], (Cout1,), jnp.float32))
    out1 = conv_bn_silu(x, w1, g1, b1, m1, v1, k=1, stride=1,
                        compute_dtype=jnp.float32)
    out1 = jax.block_until_ready(out1)
    ref1 = _reference(x, w1, g1, b1, m1, v1, k=1, stride=1)
    assert jnp.allclose(out1, ref1, atol=5e-3, rtol=5e-3), \
        float(jnp.max(jnp.abs(out1 - ref1)))

    # ---- Test 5: wider Cin -> multi-step K axis (accumulator kernel path) ----
    N2, Cin2, H2, W2, Cout2 = 1, 64, 8, 8, 32
    x2 = jax.random.normal(keys[11], (N2, Cin2, H2, W2), jnp.float32)
    kk = jax.random.split(keys[11], 6)
    w2 = jax.random.normal(kk[0], (Cout2, Cin2, 3, 3), jnp.float32) / 24.0
    g2 = 1.0 + 0.1 * jax.random.normal(kk[1], (Cout2,), jnp.float32)
    b2 = 0.1 * jax.random.normal(kk[2], (Cout2,), jnp.float32)
    m2 = 0.05 * jax.random.normal(kk[3], (Cout2,), jnp.float32)
    v2 = 1.0 + 0.1 * jnp.abs(jax.random.normal(kk[4], (Cout2,), jnp.float32))
    out2 = conv_bn_silu(x2, w2, g2, b2, m2, v2, k=3, stride=1,
                        compute_dtype=jnp.float32)
    out2 = jax.block_until_ready(out2)
    ref2 = _reference(x2, w2, g2, b2, m2, v2, k=3, stride=1)
    assert out2.shape == ref2.shape, (out2.shape, ref2.shape)
    assert jnp.allclose(out2, ref2, atol=5e-3, rtol=5e-3), \
        float(jnp.max(jnp.abs(out2 - ref2)))

    print("KERNEL_OK")
</pallas_src>

<mosaic_0001>
module attributes {stable_mosaic.version = 11 : i64} {
  func.func @_gemm_bn_silu_single_kernel(%arg0: i32, %arg1: i32, %arg2: memref<256x128xf32, #tpu.memory_space<vmem>>, %arg3: memref<128x128xf32, #tpu.memory_space<vmem>>, %arg4: memref<1x128xf32, #tpu.memory_space<vmem>>, %arg5: memref<1x128xf32, #tpu.memory_space<vmem>>, %arg6: memref<256x128xf32, #tpu.memory_space<vmem>>) attributes {dimension_semantics = [#tpu.dimension_semantics<parallel>, #tpu.dimension_semantics<parallel>], iteration_bounds = array<i64: 2, 1>, scalar_prefetch = 0 : i64, scratch_operands = 0 : i64, tpu.core_type = #tpu.core_type<tc>, window_params = [{transform_indices = @transform_0, window_bounds = array<i64: 256, 128>}, {transform_indices = @transform_1, window_bounds = array<i64: 128, 128>}, {transform_indices = @transform_2, window_bounds = array<i64: 1, 128>}, {transform_indices = @transform_3, window_bounds = array<i64: 1, 128>}, {transform_indices = @transform_4, window_bounds = array<i64: 256, 128>}]} {
    %c0 = arith.constant 0 : index
    %c0_0 = arith.constant 0 : index
    %0 = vector.load %arg2[%c0, %c0_0] : memref<256x128xf32, #tpu.memory_space<vmem>>, vector<256x128xf32>
    %c0_1 = arith.constant 0 : index
    %c0_2 = arith.constant 0 : index
    %1 = vector.load %arg3[%c0_1, %c0_2] : memref<128x128xf32, #tpu.memory_space<vmem>>, vector<128x128xf32>
    %cst = arith.constant dense<0.000000e+00> : vector<256x128xf32>
    %2 = tpu.matmul %0, %1, %cst {dimension_numbers = #tpu.dot_dimension_numbers<[1], [0], [0], [1], [0, 0, 1, 1], [], []>} : vector<256x128xf32>, vector<128x128xf32>, vector<256x128xf32> -> vector<256x128xf32>
    %c0_3 = arith.constant 0 : index
    %c0_4 = arith.constant 0 : index
    %3 = vector.load %arg4[%c0_3, %c0_4] : memref<1x128xf32, #tpu.memory_space<vmem>>, vector<1x128xf32>
    %4 = vector.broadcast %3 : vector<1x128xf32> to vector<256x128xf32>
    %5 = arith.mulf %2, %4 : vector<256x128xf32>
    %c0_5 = arith.constant 0 : index
    %c0_6 = arith.constant 0 : index
    %6 = vector.load %arg5[%c0_5, %c0_6] : memref<1x128xf32, #tpu.memory_space<vmem>>, vector<1x128xf32>
    %7 = vector.broadcast %6 : vector<1x128xf32> to vector<256x128xf32>
    %8 = arith.addf %5, %7 : vector<256x128xf32>
    %cst_7 = arith.constant 0.000000e+00 : f32
    %9 = vector.broadcast %cst_7 : f32 to vector<256x128xf32>
    %10 = arith.subf %9, %8 : vector<256x128xf32>
    %11 = math.exp %10 : vector<256x128xf32>
    %cst_8 = arith.constant 1.000000e+00 : f32
    %12 = vector.broadcast %cst_8 : f32 to vector<256x128xf32>
    %13 = arith.addf %12, %11 : vector<256x128xf32>
    %14 = tpu.reciprocal %13 {approx = true} : vector<256x128xf32> -> vector<256x128xf32>
    %15 = arith.mulf %8, %14 : vector<256x128xf32>
    %c0_9 = arith.constant 0 : index
    %c0_10 = arith.constant 0 : index
    %16 = vector.load %arg6[%c0_9, %c0_10] : memref<256x128xf32, #tpu.memory_space<vmem>>, vector<256x128xf32>
    tpu.vector_store %arg6[%c0_9, %c0_10], %15 {strides = array<i32>} : memref<256x128xf32, #tpu.memory_space<vmem>>, vector<256x128xf32>,
    return
  }
  func.func @transform_0(%arg0: i32, %arg1: i32) -> (i32, i32) {
    %c0_i32 = arith.constant 0 : i32
    %c0_i32_0 = arith.constant 0 : i32
    return %arg0, %c0_i32 : i32, i32
  }
  func.func @transform_1(%arg0: i32, %arg1: i32) -> (i32, i32) {
    %c0_i32 = arith.constant 0 : i32
    %c0_i32_0 = arith.constant 0 : i32
    return %c0_i32, %arg1 : i32, i32
  }
  func.func @transform_2(%arg0: i32, %arg1: i32) -> (i32, i32) {
    %c0_i32 = arith.constant 0 : i32
    %c0_i32_0 = arith.constant 0 : i32
    return %c0_i32, %arg1 : i32, i32
  }
  func.func @transform_3(%arg0: i32, %arg1: i32) -> (i32, i32) {
    %c0_i32 = arith.constant 0 : i32
    %c0_i32_0 = arith.constant 0 : i32
    return %c0_i32, %arg1 : i32, i32
  }
  func.func @transform_4(%arg0: i32, %arg1: i32) -> (i32, i32) {
    %c0_i32 = arith.constant 0 : i32
    return %arg0, %arg1 : i32, i32
  }
}

</mosaic_0001>

<llo_original>
// kernel: tpu_custom_call.1
$region0: #{tpu_custom_call.1}
  #allocation0 [shape = 'u32[]', space=smem, size = 0x4, offset = 0x4, fixed_abs, tag = 'smem constant byte address 0x4 - core index']
  #allocation1 [shape = 'u32[144,128]{1,0:T(1,128)}', space=vmem, size = 0x12000, scoped, tag = 'internal scratch']
  %s0 = inlined_call_operand.hbm [shape: f32[512,128], index: 0, kind: input, shape index: {}]
  %s1 = inlined_call_operand.hbm [shape: f32[128,128], index: 1, kind: input, shape index: {}]
  %s2 = inlined_call_operand.hbm [shape: f32[1,128], index: 2, kind: input, shape index: {}]
  %s3 = inlined_call_operand.hbm [shape: f32[1,128], index: 3, kind: input, shape index: {}]
  %s4 = inlined_call_operand.hbm [shape: f32[512,128], index: 4, kind: output, shape index: {}]
  %s5 = sld [smem:[#allocation0]]
  $region65: #{tpu_custom_call.1} parent=0
    _
  %s7 = ssub.s32 1, %s5
  %s8 = scalar_select 0, %s7, %s5
  $region1: #{tpu_custom_call.1} parent=0
    #allocation2 [shape = 'u8[262144]{0}', space=vmem, size = 0x40000, scoped, tag = 'input window, operand 0']
    #allocation3 [shape = 's32[2]{0}', space=sflag, size = 0x8, scoped, tag = 'scoped memory for tpu_custom_call.1']
    #allocation4 [shape = 's32[2]{0}', space=sflag, size = 0x8, scoped, tag = 'scoped memory for tpu_custom_call.1']
    #allocation5 [shape = 'u8[65536]{0}', space=vmem, size = 0x10000, scoped, tag = 'input window, operand 1, single buffered']
    #allocation6 [shape = 's32[1]{0}', space=sflag, size = 0x4, scoped, tag = 'scoped memory for tpu_custom_call.1']
    #allocation7 [shape = 'u8[512]{0}', space=vmem, size = 0x400, scoped, tag = 'input window, operand 2, single buffered']
    #allocation8 [shape = 'u8[512]{0}', space=vmem, size = 0x400, scoped, tag = 'input window, operand 3, single buffered']
    #allocation9 [shape = 's32[1]{0}', space=sflag, size = 0x4, scoped, tag = 'scoped memory for tpu_custom_call.1']
    #allocation10 [shape = 'u8[262144]{0}', space=vmem, size = 0x40000, scoped, tag = 'output window, operand 0']
    %9 = vsyncpa [#allocation3], 0
    %s10 = scalar_lea.sflag [#allocation3], 1
    %11 = vsyncpa %s10, 0
    %12 = vsyncpa [#allocation6], 0
    %13 = vsyncpa [#allocation9], 0
    %14 = vsyncpa [#allocation4], 0
    %s15 = scalar_lea.sflag [#allocation4], 1
    %16 = vsyncpa %s15, 0
    loop: start=0, step=1, limit=4
    $region2: #{tpu_custom_call.1} parent=1 // loop_pre_header
      _
    $region3: #{tpu_custom_call.1} parent=1 // loop_header
      %s18 = sphi 0, %s22
      %p19 = scmp.ge.s32.totalorder %s18, 4
      %s25 = sphi 0, %s37
      %s26 = sphi 0, %s33
      %s27 = sphi 0, %s25
      %s28 = sphi 0, %s26
      %s29 = sphi 0, %s27
      %s30 = sphi 0, %s28
      %s40 = sphi 0, %s42
      %s43 = sphi 0, %s40
      %s44 = sphi 0, %s43
      %s60 = sphi 0, %s44
      %s66 = sphi 0, %s68
      %s69 = sphi 0, %s66
      %s70 = sphi 0, %s69
      %s86 = sphi 0, %s70
      %s92 = sphi 0, %s94
      %s95 = sphi 0, %s92
      %s96 = sphi 0, %s95
      %s112 = sphi 0, %s96
      %s118 = sphi 0, %s120
      %s121 = sphi 0, %s118
      %s122 = sphi 0, %s121
      %s138 = sphi 0, %s122
      %s146 = sphi 0, %s148
      %s149 = sphi 0, %s146
      %s150 = sphi 0, %s149
      %s166 = sphi 0, %s150
    $region4: #{tpu_custom_call.1} parent=1 // loop_header_branch
      %21 = sbr.rel (%p19) target = $region8
    $region5: #{tpu_custom_call.1} parent=1 // loop_body
      %s23 = ssub.s32 %s18, 1
      %s24 = ssub.s32 %s18, 2
      %s31 = sadd.s32 1, %s26
      %p32 = scmp.ge.s32.totalorder %s31, 1
      %s33 = scalar_select %p32, 0, %s31
      %s34 = sadd.s32 1, %s25
      %s35 = scalar_select %p32, %s34, %s25
      %p36 = scmp.ge.s32.totalorder %s35, 2
      %s37 = scalar_select %p36, 0, %s35
      %s38 = ssub.s32 %s25, %s37
      %p39 = scmp.eq.s32.totalorder %s38, 0
      %s41 = sadd.s32 %s40, 1
      %s42 = scalar_select %p39, %s40, %s41
      %p45 = pneg %p39
      %p46 = scmp.eq.s32.totalorder %s18, 1
      %p47 = por %p45, %p46
      %p48 = scmp.ne.s32.totalorder %s40, %s43
      %p49 = scmp.eq.s32.totalorder %s18, 0
      %p50 = por %p48, %p49
      %p51 = scmp.ne.s32.totalorder %s40, %s43
      %p52 = scmp.eq.s32.totalorder %s23, 1
      %p53 = por %p51, %p52
      %p54 = scmp.ne.s32.totalorder %s43, %s44
      %p55 = scmp.eq.s32.totalorder %s23, 0
      %p56 = por %p54, %p55
      %p57 = scmp.ne.s32.totalorder %s43, %s44
      %p58 = scmp.eq.s32.totalorder %s24, 1
      %p59 = por %p57, %p58
      %p61 = scmp.ne.s32.totalorder %s44, %s60
      %p62 = scmp.eq.s32.totalorder %s24, 0
      %p63 = por %p61, %p62
      %s64 = ssub.s32 %s26, %s33
      %p65 = scmp.eq.s32.totalorder %s64, 0
      %s67 = sadd.s32 %s66, 1
      %s68 = scalar_select %p65, %s66, %s67
      %p71 = pneg %p65
      %p72 = scmp.eq.s32.totalorder %s18, 1
      %p73 = por %p71, %p72
      %p74 = scmp.ne.s32.totalorder %s66, %s69
      %p75 = scmp.eq.s32.totalorder %s18, 0
      %p76 = por %p74, %p75
      %p77 = scmp.ne.s32.totalorder %s66, %s69
      %p78 = scmp.eq.s32.totalorder %s23, 1
      %p79 = por %p77, %p78
      %p80 = scmp.ne.s32.totalorder %s69, %s70
      %p81 = scmp.eq.s32.totalorder %s23, 0
      %p82 = por %p80, %p81
      %p83 = scmp.ne.s32.totalorder %s69, %s70
      %p84 = scmp.eq.s32.totalorder %s24, 1
      %p85 = por %p83, %p84
      %p87 = scmp.ne.s32.totalorder %s70, %s86
      %p88 = scmp.eq.s32.totalorder %s24, 0
      %p89 = por %p87, %p88
      %s90 = ssub.s32 %s26, %s33
      %p91 = scmp.eq.s32.totalorder %s90, 0
      %s93 = sadd.s32 %s92, 1
      %s94 = scalar_select %p91, %s92, %s93
      %p97 = pneg %p91
      %p98 = scmp.eq.s32.totalorder %s18, 1
      %p99 = por %p97, %p98
      %p100 = scmp.ne.s32.totalorder %s92, %s95
      %p101 = scmp.eq.s32.totalorder %s18, 0
      %p102 = por %p100, %p101
      %p103 = scmp.ne.s32.totalorder %s92, %s95
      %p104 = scmp.eq.s32.totalorder %s23, 1
      %p105 = por %p103, %p104
      %p106 = scmp.ne.s32.totalorder %s95, %s96
      %p107 = scmp.eq.s32.totalorder %s23, 0
      %p108 = por %p106, %p107
      %p109 = scmp.ne.s32.totalorder %s95, %s96
      %p110 = scmp.eq.s32.totalorder %s24, 1
      %p111 = por %p109, %p110
      %p113 = scmp.ne.s32.totalorder %s96, %s112
      %p114 = scmp.eq.s32.totalorder %s24, 0
      %p115 = por %p113, %p114
      %s116 = ssub.s32 %s26, %s33
      %p117 = scmp.eq.s32.totalorder %s116, 0
      %s119 = sadd.s32 %s118, 1
      %s120 = scalar_select %p117, %s118, %s119
      %p123 = pneg %p117
      %p124 = scmp.eq.s32.totalorder %s18, 1
      %p125 = por %p123, %p124
      %p126 = scmp.ne.s32.totalorder %s118, %s121
      %p127 = scmp.eq.s32.totalorder %s18, 0
      %p128 = por %p126, %p127
      %p129 = scmp.ne.s32.totalorder %s118, %s121
      %p130 = scmp.eq.s32.totalorder %s23, 1
      %p131 = por %p129, %p130
      %p132 = scmp.ne.s32.totalorder %s121, %s122
      %p133 = scmp.eq.s32.totalorder %s23, 0
      %p134 = por %p132, %p133
      %p135 = scmp.ne.s32.totalorder %s121, %s122
      %p136 = scmp.eq.s32.totalorder %s24, 1
      %p137 = por %p135, %p136
      %p139 = scmp.ne.s32.totalorder %s122, %s138
      %p140 = scmp.eq.s32.totalorder %s24, 0
      %p141 = por %p139, %p140
      %s142 = ssub.s32 %s25, %s37
      %s143 = ssub.s32 %s26, %s33
      %s144 = sor.u32 %s142, %s143
      %p145 = scmp.eq.s32.totalorder %s144, 0
      %s147 = sadd.s32 %s146, 1
      %s148 = scalar_select %p145, %s146, %s147
      %p151 = pneg %p145
      %p152 = scmp.eq.s32.totalorder %s18, 1
      %p153 = por %p151, %p152
      %p154 = scmp.ne.s32.totalorder %s146, %s149
      %p155 = scmp.eq.s32.totalorder %s18, 0
      %p156 = por %p154, %p155
      %p157 = scmp.ne.s32.totalorder %s146, %s149
      %p158 = scmp.eq.s32.totalorder %s23, 1
      %p159 = por %p157, %p158
      %p160 = scmp.ne.s32.totalorder %s149, %s150
      %p161 = scmp.eq.s32.totalorder %s23, 0
      %p162 = por %p160, %p161
      %p163 = scmp.ne.s32.totalorder %s149, %s150
      %p164 = scmp.eq.s32.totalorder %s24, 1
      %p165 = por %p163, %p164
      %p167 = scmp.ne.s32.totalorder %s150, %s166
      %p168 = scmp.eq.s32.totalorder %s24, 0
      %p169 = por %p167, %p168
      %p170 = scmp.le.s32.totalorder 1, %s18
      %p171 = scmp.lt.s32.totalorder %s18, 3
      %p172 = pnand %p170, %p171
      %p173 = pneg %p172
      // Predicated region
      $region9: #{tpu_custom_call.1} parent=5 // pred_check
        _
      $region10: #{tpu_custom_call.1} parent=5 // pred_check_branch
        %175 = sbr.rel (%p172) target = $region12
      $region11: #{tpu_custom_call.1} parent=5 // pred_region
        %s176 = ssub.s32 %s18, 1
        // Predicated region
        $region13: #{tpu_custom_call.1} parent=11 // pred_check
          %p177 = pneg %p82
        $region14: #{tpu_custom_call.1} parent=11 // pred_check_branch
          %179 = sbr.rel (%p177) target = $region16
        $region15: #{tpu_custom_call.1} parent=11 // pred_region
          %s181 = ssub.s32 2048, 2048
          %182 = vsyncadd [#allocation6], %s181
          %s183 = smul.addr %s28, 128
          %s184 = scalar_lea.hbm %s1, %s183
          %s185 = sshll.u32 [#allocation5], 4
          %s186 = int_to_ptr.vmem [resolvable:$true] %s185
          %191 = dma.hbm_to_vmem [thread:$0]  %s184, 2048, %s186, [#allocation6], 128, 128, 8
        $region16: #{tpu_custom_call.1} parent=11 // pred_fallthru
          _
        // Predicated region
        $region17: #{tpu_custom_call.1} parent=11 // pred_check
          %p192 = pneg %p108
        $region18: #{tpu_custom_call.1} parent=11 // pred_check_branch
          %194 = sbr.rel (%p192) target = $region20
        $region19: #{tpu_custom_call.1} parent=11 // pred_region
          %s196 = ssub.s32 16, 16
          %197 = vsyncadd [#allocation6], %s196
          %s198 = smul.addr %s28, 16
          %s199 = scalar_lea.hbm %s2, %s198
          %s201 = sshll.u32 [#allocation7], 4
          %s202 = int_to_ptr.vmem [resolvable:$true] %s201
          %204 = dma.hbm_to_vmem [thread:$0]  %s199, 16, %s202, [#allocation6]
        $region20: #{tpu_custom_call.1} parent=11 // pred_fallthru
          _
        // Predicated region
        $region21: #{tpu_custom_call.1} parent=11 // pred_check
          %p205 = pneg %p134
        $region22: #{tpu_custom_call.1} parent=11 // pred_check_branch
          %207 = sbr.rel (%p205) target = $region24
        $region23: #{tpu_custom_call.1} parent=11 // pred_region
          %s209 = ssub.s32 16, 16
          %210 = vsyncadd [#allocation9], %s209
          %s211 = smul.addr %s28, 16
          %s212 = scalar_lea.hbm %s3, %s211
          %s214 = sshll.u32 [#allocation8], 4
          %s215 = int_to_ptr.vmem [resolvable:$true] %s214
          %217 = dma.hbm_to_vmem [thread:$0]  %s212, 16, %s215, [#allocation9]
        $region24: #{tpu_custom_call.1} parent=11 // pred_fallthru
          _
      $region12: #{tpu_custom_call.1} parent=5 // pred_fallthru
        _
      %p218 = scmp.lt.s32.totalorder %s18, 2
      // Predicated region
      $region25: #{tpu_custom_call.1} parent=5 // pred_check
        %p219 = pneg %p218
      $region26: #{tpu_custom_call.1} parent=5 // pred_check_branch
        %221 = sbr.rel (%p219) target = $region28
      $region27: #{tpu_custom_call.1} parent=5 // pred_region
        // Predicated region
        $region29: #{tpu_custom_call.1} parent=27 // pred_check
          %p222 = pneg %p50
        $region30: #{tpu_custom_call.1} parent=27 // pred_check_branch
          %224 = sbr.rel (%p222) target = $region32
        $region31: #{tpu_custom_call.1} parent=27 // pred_region
          %s225 = sand.u32 %s40, 1
          %s226 = scalar_lea.sflag [#allocation3], %s225
          %s227 = sand.u32 %s40, 1
          %s228 = smul.addr %s227, 256
          %s229 = scalar_lea.vmem [#allocation2], %s228
          %s230 = smul.u32 32, %s25
          %s232 = ssub.s32 4096, 4096
          %233 = vsyncadd %s226, %s232
          %s234 = smul.addr %s230, 128
          %s235 = scalar_lea.hbm %s0, %s234
          %s236 = sshll.u32 %s229, 4
          %s237 = int_to_ptr.vmem [resolvable:$true] %s236
          %242 = dma.hbm_to_vmem [thread:$0]  %s235, 4096, %s237, %s226, 128, 128, 8
        $region32: #{tpu_custom_call.1} parent=27 // pred_fallthru
          _
      $region28: #{tpu_custom_call.1} parent=5 // pred_fallthru
        _
      %p243 = scmp.le.s32.totalorder 1, %s18
      %p244 = scmp.lt.s32.totalorder %s18, 3
      %p245 = pnand %p243, %p244
      %p246 = pneg %p245
      // Predicated region
      $region33: #{tpu_custom_call.1} parent=5 // pred_check
        _
      $region34: #{tpu_custom_call.1} parent=5 // pred_check_branch
        %248 = sbr.rel (%p245) target = $region36
      $region35: #{tpu_custom_call.1} parent=5 // pred_region
        %s249 = ssub.s32 %s18, 1
        %s250 = sand.u32 %s43, 1
        %s251 = scalar_lea.sflag [#allocation3], %s250
        %s252 = sand.u32 %s43, 1
        %s253 = smul.addr %s252, 256
        %s254 = scalar_lea.vmem [#allocation2], %s253
        // Predicated region
        $region37: #{tpu_custom_call.1} parent=35 // pred_check
          %p255 = pneg %p56
        $region38: #{tpu_custom_call.1} parent=35 // pred_check_branch
          %257 = sbr.rel (%p255) target = $region40
        $region39: #{tpu_custom_call.1} parent=35 // pred_region
          %258 = dma.done %s251, 4096
        $region40: #{tpu_custom_call.1} parent=35 // pred_fallthru
          _
        // Predicated region
        $region41: #{tpu_custom_call.1} parent=35 // pred_check
          %p259 = pneg %p82
        $region42: #{tpu_custom_call.1} parent=35 // pred_check_branch
          %261 = sbr.rel (%p259) target = $region44
        $region43: #{tpu_custom_call.1} parent=35 // pred_region
          %262 = dma.done [#allocation6], 2048
        $region44: #{tpu_custom_call.1} parent=35 // pred_fallthru
          _
        // Predicated region
        $region45: #{tpu_custom_call.1} parent=35 // pred_check
          %p263 = pneg %p108
        $region46: #{tpu_custom_call.1} parent=35 // pred_check_branch
          %265 = sbr.rel (%p263) target = $region48
        $region47: #{tpu_custom_call.1} parent=35 // pred_region
          %266 = dma.done [#allocation6], 16
        $region48: #{tpu_custom_call.1} parent=35 // pred_fallthru
          _
        // Predicated region
        $region49: #{tpu_custom_call.1} parent=35 // pred_check
          %p267 = pneg %p134
        $region50: #{tpu_custom_call.1} parent=35 // pred_check_branch
          %269 = sbr.rel (%p267) target = $region52
        $region51: #{tpu_custom_call.1} parent=35 // pred_region
          %270 = dma.done [#allocation9], 16
        $region52: #{tpu_custom_call.1} parent=35 // pred_fallthru
          _
        %s271 = sand.u32 %s43, 1
        %s272 = scalar_lea.sflag [#allocation3], %s271
        %s273 = sand.u32 %s43, 1
        %s274 = smul.addr %s273, 256
        %s275 = scalar_lea.vmem [#allocation2], %s274
        %p276 = pneg %p56
        %p277 = pneg %p53
        %p278 = pneg %p82
        %p279 = pneg %p79
        %p280 = pneg %p108
        %p281 = pneg %p105
        %p282 = pneg %p134
        %p283 = pneg %p131
        %p284 = pneg %p162
        %p285 = pneg %p159
        %s286 = sand.u32 %s149, 1
        %s287 = scalar_lea.sflag [#allocation4], %s286
        %s288 = sand.u32 %s149, 1
        %s289 = smul.addr %s288, 256
        %s290 = scalar_lea.vmem [#allocation10], %s289
        %s291 = smul.u32 32, %s27
        %s292 = smul.u32 32, %s27
        %v293 = vld [vmem:[%s254] sm:$0xff]
        %v294 = vld [vmem:[%s254 + $0x8] sm:$0xff]
        %v295 = vld [vmem:[%s254 + $0x10] sm:$0xff]
        %v296 = vld [vmem:[%s254 + $0x18] sm:$0xff]
        %v297 = vld [vmem:[%s254 + $0x20] sm:$0xff]
        %v298 = vld [vmem:[%s254 + $0x28] sm:$0xff]
        %v299 = vld [vmem:[%s254 + $0x30] sm:$0xff]
        %v300 = vld [vmem:[%s254 + $0x38] sm:$0xff]
        %v301 = vld [vmem:[%s254 + $0x40] sm:$0xff]
        %v302 = vld [vmem:[%s254 + $0x48] sm:$0xff]
        %v303 = vld [vmem:[%s254 + $0x50] sm:$0xff]
        %v304 = vld [vmem:[%s254 + $0x58] sm:$0xff]
        %v305 = vld [vmem:[%s254 + $0x60] sm:$0xff]
        %v306 = vld [vmem:[%s254 + $0x68] sm:$0xff]
        %v307 = vld [vmem:[%s254 + $0x70] sm:$0xff]
        %v308 = vld [vmem:[%s254 + $0x78] sm:$0xff]
        %v309 = vld [vmem:[%s254 + $0x80] sm:$0xff]
        %v310 = vld [vmem:[%s254 + $0x88] sm:$0xff]
        %v311 = vld [vmem:[%s254 + $0x90] sm:$0xff]
        %v312 = vld [vmem:[%s254 + $0x98] sm:$0xff]
        %v313 = vld [vmem:[%s254 + $0xa0] sm:$0xff]
        %v314 = vld [vmem:[%s254 + $0xa8] sm:$0xff]
        %v315 = vld [vmem:[%s254 + $0xb0] sm:$0xff]
        %v316 = vld [vmem:[%s254 + $0xb8] sm:$0xff]
        %v317 = vld [vmem:[%s254 + $0xc0] sm:$0xff]
        %v318 = vld [vmem:[%s254 + $0xc8] sm:$0xff]
        %v319 = vld [vmem:[%s254 + $0xd0] sm:$0xff]
        %v320 = vld [vmem:[%s254 + $0xd8] sm:$0xff]
        %v321 = vld [vmem:[%s254 + $0xe0] sm:$0xff]
        %v322 = vld [vmem:[%s254 + $0xe8] sm:$0xff]
        %v323 = vld [vmem:[%s254 + $0xf0] sm:$0xff]
        %v324 = vld [vmem:[%s254 + $0xf8] sm:$0xff]
        %v325 = vld [vmem:[#allocation5] sm:$0xff]
        %v326 = vld [vmem:[#allocation5 + $0x8] sm:$0xff]
        %v327 = vld [vmem:[#allocation5 + $0x10] sm:$0xff]
        %v328 = vld [vmem:[#allocation5 + $0x18] sm:$0xff]
        %v329 = vld [vmem:[#allocation5 + $0x20] sm:$0xff]
        %v330 = vld [vmem:[#allocation5 + $0x28] sm:$0xff]
        %v331 = vld [vmem:[#allocation5 + $0x30] sm:$0xff]
        %v332 = vld [vmem:[#allocation5 + $0x38] sm:$0xff]
        %v333 = vld [vmem:[#allocation5 + $0x40] sm:$0xff]
        %v334 = vld [vmem:[#allocation5 + $0x48] sm:$0xff]
        %v335 = vld [vmem:[#allocation5 + $0x50] sm:$0xff]
        %v336 = vld [vmem:[#allocation5 + $0x58] sm:$0xff]
        %v337 = vld [vmem:[#allocation5 + $0x60] sm:$0xff]
        %v338 = vld [vmem:[#allocation5 + $0x68] sm:$0xff]
        %v339 = vld [vmem:[#allocation5 + $0x70] sm:$0xff]
        %v340 = vld [vmem:[#allocation5 + $0x78] sm:$0xff]
        %341 = vmatprep.subr.mxu0 0.0
        %342 = vmatpush1.msra.mxu0 %v325
        %343 = vmatprep.subr.mxu0 0.0
        %344 = vmatpush1.msra.mxu0 %v326
        %345 = vmatprep.subr.mxu0 0.0
        %346 = vmatpush1.msra.mxu0 %v327
        %347 = vmatprep.subr.mxu0 0.0
        %348 = vmatpush1.msra.mxu0 %v328
        %349 = vmatprep.subr.mxu0 0.0
        %350 = vmatpush1.msra.mxu0 %v329
        %351 = vmatprep.subr.mxu0 0.0
        %352 = vmatpush1.msra.mxu0 %v330
        %353 = vmatprep.subr.mxu0 0.0
        %354 = vmatpush1.msra.mxu0 %v331
        %355 = vmatprep.subr.mxu0 0.0
        %356 = vmatpush1.msra.mxu0 %v332
        %357 = vmatprep.subr.mxu0 0.0
        %358 = vmatpush1.msra.mxu0 %v333
        %359 = vmatprep.subr.mxu0 0.0
        %360 = vmatpush1.msra.mxu0 %v334
        %361 = vmatprep.subr.mxu0 0.0
        %362 = vmatpush1.msra.mxu0 %v335
        %363 = vmatprep.subr.mxu0 0.0
        %364 = vmatpush1.msra.mxu0 %v336
        %365 = vmatprep.subr.mxu0 0.0
        %366 = vmatpush1.msra.mxu0 %v337
        %367 = vmatprep.subr.mxu0 0.0
        %368 = vmatpush1.msra.mxu0 %v338
        %369 = vmatprep.subr.mxu0 0.0
        %370 = vmatpush1.msra.mxu0 %v339
        %371 = vmatprep.subr.mxu0 0.0
        %372 = vmatpush1.msra.mxu0 %v340
        %373 = vmatprep.subr.mxu0 0.0
        %374 = vmatpush1.msra.mxu0 0.0
        %375 = vmatprep.subr.mxu0 0.0
        %376 = vmatpush1.msra.mxu0 0.0
        %377 = vmatprep.subr.mxu0 0.0
        %378 = vmatpush1.msra.mxu0 0.0
        %379 = vmatprep.subr.mxu0 0.0
        %380 = vmatpush1.msra.mxu0 0.0
        %381 = vmatprep.subr.mxu0 0.0
        %382 = vmatpush1.msra.mxu0 0.0
        %383 = vmatprep.subr.mxu0 0.0
        %384 = vmatpush1.msra.mxu0 0.0
        %385 = vmatprep.subr.mxu0 0.0
        %386 = vmatpush1.msra.mxu0 0.0
        %387 = vmatprep.subr.mxu0 0.0
        %388 = vmatpush1.msra.mxu0 0.0
        %389 = vmatprep.subr.mxu0 0.0
        %390 = vmatpush1.msra.mxu0 0.0
        %391 = vmatprep.subr.mxu0 0.0
        %392 = vmatpush1.msra.mxu0 0.0
        %393 = vmatprep.subr.mxu0 0.0
        %394 = vmatpush1.msra.mxu0 0.0
        %395 = vmatprep.subr.mxu0 0.0
        %396 = vmatpush1.msra.mxu0 0.0
        %397 = vmatprep.subr.mxu0 0.0
        %398 = vmatpush1.msra.mxu0 0.0
        %399 = vmatprep.subr.mxu0 0.0
        %400 = vmatpush1.msra.mxu0 0.0
        %401 = vmatprep.subr.mxu0 0.0
        %402 = vmatpush1.msra.mxu0 0.0
        %403 = vmatprep.subr.mxu0 0.0
        %404 = vmatpush1.msra.mxu0 0.0
        %405 = vmatprep.mubr.f32.mxu0 0.0
        %406 = vmatmul.mubr.f32.gmra.mrb[0].mxu0 %v293
        %v407 = vpop.f32.mrb[0].mxu0
        %v408 = vadd.f32 0.0, %v407
        %v409 = vpop.f32.mrb[0].mxu0
        %410 = vmatprep.mubr.f32.mxu0 0.0
        %411 = vmatmul.mubr.f32.gmra.mrb[0].mxu0 %v294
        %v412 = vpop.f32.mrb[0].mxu0
        %v413 = vadd.f32 0.0, %v412
        %v414 = vpop.f32.mrb[0].mxu0
        %415 = vmatprep.mubr.f32.mxu0 0.0
        %416 = vmatmul.mubr.f32.gmra.mrb[0].mxu0 %v295
        %v417 = vpop.f32.mrb[0].mxu0
        %v418 = vadd.f32 0.0, %v417
        %v419 = vpop.f32.mrb[0].mxu0
        %420 = vmatprep.mubr.f32.mxu0 0.0
        %421 = vmatmul.mubr.f32.gmra.mrb[0].mxu0 %v296
        %v422 = vpop.f32.mrb[0].mxu0
        %v423 = vadd.f32 0.0, %v422
        %v424 = vpop.f32.mrb[0].mxu0
        %425 = vmatprep.mubr.f32.mxu0 0.0
        %426 = vmatmul.mubr.f32.gmra.mrb[0].mxu0 %v297
        %v427 = vpop.f32.mrb[0].mxu0
        %v428 = vadd.f32 0.0, %v427
        %v429 = vpop.f32.mrb[0].mxu0
        %430 = vmatprep.mubr.f32.mxu0 0.0
        %431 = vmatmul.mubr.f32.gmra.mrb[0].mxu0 %v298
        %v432 = vpop.f32.mrb[0].mxu0
        %v433 = vadd.f32 0.0, %v432
        %v434 = vpop.f32.mrb[0].mxu0
        %435 = vmatprep.mubr.f32.mxu0 0.0
        %436 = vmatmul.mubr.f32.gmra.mrb[0].mxu0 %v299
        %v437 = vpop.f32.mrb[0].mxu0
        %v438 = vadd.f32 0.0, %v437
        %v439 = vpop.f32.mrb[0].mxu0
        %440 = vmatprep.mubr.f32.mxu0 0.0
        %441 = vmatmul.mubr.f32.gmra.mrb[0].mxu0 %v300
        %v442 = vpop.f32.mrb[0].mxu0
        %v443 = vadd.f32 0.0, %v442
        %v444 = vpop.f32.mrb[0].mxu0
        %445 = vmatprep.mubr.f32.mxu0 0.0
        %446 = vmatmul.mubr.f32.gmra.mrb[0].mxu0 %v301
        %v447 = vpop.f32.mrb[0].mxu0
        %v448 = vadd.f32 0.0, %v447
        %v449 = vpop.f32.mrb[0].mxu0
        %450 = vmatprep.mubr.f32.mxu0 0.0
        %451 = vmatmul.mubr.f32.gmra.mrb[0].mxu0 %v302
        %v452 = vpop.f32.mrb[0].mxu0
        %v453 = vadd.f32 0.0, %v452
        %v454 = vpop.f32.mrb[0].mxu0
        %455 = vmatprep.mubr.f32.mxu0 0.0
        %456 = vmatmul.mubr.f32.gmra.mrb[0].mxu0 %v303
        %v457 = vpop.f32.mrb[0].mxu0
        %v458 = vadd.f32 0.0, %v457
        %v459 = vpop.f32.mrb[0].mxu0
        %460 = vmatprep.mubr.f32.mxu0 0.0
        %461 = vmatmul.mubr.f32.gmra.mrb[0].mxu0 %v304
        %v462 = vpop.f32.mrb[0].mxu0
        %v463 = vadd.f32 0.0, %v462
        %v464 = vpop.f32.mrb[0].mxu0
        %465 = vmatprep.mubr.f32.mxu0 0.0
        %466 = vmatmul.mubr.f32.gmra.mrb[0].mxu0 %v305
        %v467 = vpop.f32.mrb[0].mxu0
        %v468 = vadd.f32 0.0, %v467
        %v469 = vpop.f32.mrb[0].mxu0
        %470 = vmatprep.mubr.f32.mxu0 0.0
        %471 = vmatmul.mubr.f32.gmra.mrb[0].mxu0 %v306
        %v472 = vpop.f32.mrb[0].mxu0
        %v473 = vadd.f32 0.0, %v472
        %v474 = vpop.f32.mrb[0].mxu0
        %475 = vmatprep.mubr.f32.mxu0 0.0
        %476 = vmatmul.mubr.f32.gmra.mrb[0].mxu0 %v307
        %v477 = vpop.f32.mrb[0].mxu0
        %v478 = vadd.f32 0.0, %v477
        %v479 = vpop.f32.mrb[0].mxu0
        %480 = vmatprep.mubr.f32.mxu0 0.0
        %481 = vmatmul.mubr.f32.gmra.mrb[0].mxu0 %v308
        %v482 = vpop.f32.mrb[0].mxu0
        %v483 = vadd.f32 0.0, %v482
        %v484 = vpop.f32.mrb[0].mxu0
        %485 = vmatprep.mubr.f32.mxu0 0.0
        %486 = vmatmul.mubr.f32.gmra.mrb[0].mxu0 %v309
        %v487 = vpop.f32.mrb[0].mxu0
        %v488 = vadd.f32 0.0, %v487
        %v489 = vpop.f32.mrb[0].mxu0
        %490 = vmatprep.mubr.f32.mxu0 0.0
        %491 = vmatmul.mubr.f32.gmra.mrb[0].mxu0 %v310
        %v492 = vpop.f32.mrb[0].mxu0
        %v493 = vadd.f32 0.0, %v492
        %v494 = vpop.f32.mrb[0].mxu0
        %495 = vmatprep.mubr.f32.mxu0 0.0
        %496 = vmatmul.mubr.f32.gmra.mrb[0].mxu0 %v311
        %v497 = vpop.f32.mrb[0].mxu0
        %v498 = vadd.f32 0.0, %v497
        %v499 = vpop.f32.mrb[0].mxu0
        %500 = vmatprep.mubr.f32.mxu0 0.0
        %501 = vmatmul.mubr.f32.gmra.mrb[0].mxu0 %v312
        %v502 = vpop.f32.mrb[0].mxu0
        %v503 = vadd.f32 0.0, %v502
        %v504 = vpop.f32.mrb[0].mxu0
        %505 = vmatprep.mubr.f32.mxu0 0.0
        %506 = vmatmul.mubr.f32.gmra.mrb[0].mxu0 %v313
        %v507 = vpop.f32.mrb[0].mxu0
        %v508 = vadd.f32 0.0, %v507
        %v509 = vpop.f32.mrb[0].mxu0
        %510 = vmatprep.mubr.f32.mxu0 0.0
        %511 = vmatmul.mubr.f32.gmra.mrb[0].mxu0 %v314
        %v512 = vpop.f32.mrb[0].mxu0
        %v513 = vadd.f32 0.0, %v512
        %v514 = vpop.f32.mrb[0].mxu0
        %515 = vmatprep.mubr.f32.mxu0 0.0
        %516 = vmatmul.mubr.f32.gmra.mrb[0].mxu0 %v315
        %v517 = vpop.f32.mrb[0].mxu0
        %v518 = vadd.f32 0.0, %v517
        %v519 = vpop.f32.mrb[0].mxu0
        %520 = vmatprep.mubr.f32.mxu0 0.0
        %521 = vmatmul.mubr.f32.gmra.mrb[0].mxu0 %v316
        %v522 = vpop.f32.mrb[0].mxu0
        %v523 = vadd.f32 0.0, %v522
        %v524 = vpop.f32.mrb[0].mxu0
        %525 = vmatprep.mubr.f32.mxu0 0.0
        %526 = vmatmul.mubr.f32.gmra.mrb[0].mxu0 %v317
        %v527 = vpop.f32.mrb[0].mxu0
        %v528 = vadd.f32 0.0, %v527
        %v529 = vpop.f32.mrb[0].mxu0
        %530 = vmatprep.mubr.f32.mxu0 0.0
        %531 = vmatmul.mubr.f32.gmra.mrb[0].mxu0 %v318
        %v532 = vpop.f32.mrb[0].mxu0
        %v533 = vadd.f32 0.0, %v532
        %v534 = vpop.f32.mrb[0].mxu0
        %535 = vmatprep.mubr.f32.mxu0 0.0
        %536 = vmatmul.mubr.f32.gmra.mrb[0].mxu0 %v319
        %v537 = vpop.f32.mrb[0].mxu0
        %v538 = vadd.f32 0.0, %v537
        %v539 = vpop.f32.mrb[0].mxu0
        %540 = vmatprep.mubr.f32.mxu0 0.0
        %541 = vmatmul.mubr.f32.gmra.mrb[0].mxu0 %v320
        %v542 = vpop.f32.mrb[0].mxu0
        %v543 = vadd.f32 0.0, %v542
        %v544 = vpop.f32.mrb[0].mxu0
        %545 = vmatprep.mubr.f32.mxu0 0.0
        %546 = vmatmul.mubr.f32.gmra.mrb[0].mxu0 %v321
        %v547 = vpop.f32.mrb[0].mxu0
        %v548 = vadd.f32 0.0, %v547
        %v549 = vpop.f32.mrb[0].mxu0
        %550 = vmatprep.mubr.f32.mxu0 0.0
        %551 = vmatmul.mubr.f32.gmra.mrb[0].mxu0 %v322
        %v552 = vpop.f32.mrb[0].mxu0
        %v553 = vadd.f32 0.0, %v552
        %v554 = vpop.f32.mrb[0].mxu0
        %555 = vmatprep.mubr.f32.mxu0 0.0
        %556 = vmatmul.mubr.f32.gmra.mrb[0].mxu0 %v323
        %v557 = vpop.f32.mrb[0].mxu0
        %v558 = vadd.f32 0.0, %v557
        %v559 = vpop.f32.mrb[0].mxu0
        %560 = vmatprep.mubr.f32.mxu0 0.0
        %561 = vmatmul.mubr.f32.gmra.mrb[0].mxu0 %v324
        %v562 = vpop.f32.mrb[0].mxu0
        %v563 = vadd.f32 0.0, %v562
        %v564 = vpop.f32.mrb[0].mxu0
        %565 = vdwg.mxu0
        %v566 = vld [vmem:[#allocation7] sm:$0x1]
        %v568 = vlaneseq
        %v569 = vshrl.u32 %v568, 7
        %v570 = vsub.s32 0, %v569
        %v571 = vrot.slane %v566, %v570
        %v573 = vmul.f32 %v408, %v571
        %v574 = vmul.f32 %v413, %v571
        %v575 = vmul.f32 %v418, %v571
        %v576 = vmul.f32 %v423, %v571
        %v577 = vmul.f32 %v428, %v571
        %v578 = vmul.f32 %v433, %v571
        %v579 = vmul.f32 %v438, %v571
        %v580 = vmul.f32 %v443, %v571
        %v581 = vmul.f32 %v448, %v571
        %v582 = vmul.f32 %v453, %v571
        %v583 = vmul.f32 %v458, %v571
        %v584 = vmul.f32 %v463, %v571
        %v585 = vmul.f32 %v468, %v571
        %v586 = vmul.f32 %v473, %v571
        %v587 = vmul.f32 %v478, %v571
        %v588 = vmul.f32 %v483, %v571
        %v589 = vmul.f32 %v488, %v571
        %v590 = vmul.f32 %v493, %v571
        %v591 = vmul.f32 %v498, %v571
        %v592 = vmul.f32 %v503, %v571
        %v593 = vmul.f32 %v508, %v571
        %v594 = vmul.f32 %v513, %v571
        %v595 = vmul.f32 %v518, %v571
        %v596 = vmul.f32 %v523, %v571
        %v597 = vmul.f32 %v528, %v571
        %v598 = vmul.f32 %v533, %v571
        %v599 = vmul.f32 %v538, %v571
        %v600 = vmul.f32 %v543, %v571
        %v601 = vmul.f32 %v548, %v571
        %v602 = vmul.f32 %v553, %v571
        %v603 = vmul.f32 %v558, %v571
        %v604 = vmul.f32 %v563, %v571
        %v605 = vld [vmem:[#allocation8] sm:$0x1]
        %v607 = vlaneseq
        %v608 = vshrl.u32 %v607, 7
        %v609 = vsub.s32 0, %v608
        %v610 = vrot.slane %v605, %v609
        %v612 = vadd.f32 %v573, %v610
        %v613 = vadd.f32 %v574, %v610
        %v614 = vadd.f32 %v575, %v610
        %v615 = vadd.f32 %v576, %v610
        %v616 = vadd.f32 %v577, %v610
        %v617 = vadd.f32 %v578, %v610
        %v618 = vadd.f32 %v579, %v610
        %v619 = vadd.f32 %v580, %v610
        %v620 = vadd.f32 %v581, %v610
        %v621 = vadd.f32 %v582, %v610
        %v622 = vadd.f32 %v583, %v610
        %v623 = vadd.f32 %v584, %v610
        %v624 = vadd.f32 %v585, %v610
        %v625 = vadd.f32 %v586, %v610
        %v626 = vadd.f32 %v587, %v610
        %v627 = vadd.f32 %v588, %v610
        %v628 = vadd.f32 %v589, %v610
        %v629 = vadd.f32 %v590, %v610
        %v630 = vadd.f32 %v591, %v610
        %v631 = vadd.f32 %v592, %v610
        %v632 = vadd.f32 %v593, %v610
        %v633 = vadd.f32 %v594, %v610
        %v634 = vadd.f32 %v595, %v610
        %v635 = vadd.f32 %v596, %v610
        %v636 = vadd.f32 %v597, %v610
        %v637 = vadd.f32 %v598, %v610
        %v638 = vadd.f32 %v599, %v610
        %v639 = vadd.f32 %v600, %v610
        %v640 = vadd.f32 %v601, %v610
        %v641 = vadd.f32 %v602, %v610
        %v642 = vadd.f32 %v603, %v610
        %v643 = vadd.f32 %v604, %v610
        %v644 = vsub.f32 0.0, %v612
        %v645 = vsub.f32 0.0, %v613
        %v646 = vsub.f32 0.0, %v614
        %v647 = vsub.f32 0.0, %v615
        %v648 = vsub.f32 0.0, %v616
        %v649 = vsub.f32 0.0, %v617
        %v650 = vsub.f32 0.0, %v618
        %v651 = vsub.f32 0.0, %v619
        %v652 = vsub.f32 0.0, %v620
        %v653 = vsub.f32 0.0, %v621
        %v654 = vsub.f32 0.0, %v622
        %v655 = vsub.f32 0.0, %v623
        %v656 = vsub.f32 0.0, %v624
        %v657 = vsub.f32 0.0, %v625
        %v658 = vsub.f32 0.0, %v626
        %v659 = vsub.f32 0.0, %v627
        %v660 = vsub.f32 0.0, %v628
        %v661 = vsub.f32 0.0, %v629
        %v662 = vsub.f32 0.0, %v630
        %v663 = vsub.f32 0.0, %v631
        %v664 = vsub.f32 0.0, %v632
        %v665 = vsub.f32 0.0, %v633
        %v666 = vsub.f32 0.0, %v634
        %v667 = vsub.f32 0.0, %v635
        %v668 = vsub.f32 0.0, %v636
        %v669 = vsub.f32 0.0, %v637
        %v670 = vsub.f32 0.0, %v638
        %v671 = vsub.f32 0.0, %v639
        %v672 = vsub.f32 0.0, %v640
        %v673 = vsub.f32 0.0, %v641
        %v674 = vsub.f32 0.0, %v642
        %v675 = vsub.f32 0.0, %v643
        %v676 = vmul.f32 %v644, 1.442695
        %v677 = vpow.pop %v676
        %v678 = vmul.f32 %v645, 1.442695
        %v679 = vpow.pop %v678
        %v680 = vmul.f32 %v646, 1.442695
        %v681 = vpow.pop %v680
        %v682 = vmul.f32 %v647, 1.442695
        %v683 = vpow.pop %v682
        %v684 = vmul.f32 %v648, 1.442695
        %v685 = vpow.pop %v684
        %v686 = vmul.f32 %v649, 1.442695
        %v687 = vpow.pop %v686
        %v688 = vmul.f32 %v650, 1.442695
        %v689 = vpow.pop %v688
        %v690 = vmul.f32 %v651, 1.442695
        %v691 = vpow.pop %v690
        %v692 = vmul.f32 %v652, 1.442695
        %v693 = vpow.pop %v692
        %v694 = vmul.f32 %v653, 1.442695
        %v695 = vpow.pop %v694
        %v696 = vmul.f32 %v654, 1.442695
        %v697 = vpow.pop %v696
        %v698 = vmul.f32 %v655, 1.442695
        %v699 = vpow.pop %v698
        %v700 = vmul.f32 %v656, 1.442695
        %v701 = vpow.pop %v700
        %v702 = vmul.f32 %v657, 1.442695
        %v703 = vpow.pop %v702
        %v704 = vmul.f32 %v658, 1.442695
        %v705 = vpow.pop %v704
        %v706 = vmul.f32 %v659, 1.442695
        %v707 = vpow.pop %v706
        %v708 = vmul.f32 %v660, 1.442695
        %v709 = vpow.pop %v708
        %v710 = vmul.f32 %v661, 1.442695
        %v711 = vpow.pop %v710
        %v712 = vmul.f32 %v662, 1.442695
        %v713 = vpow.pop %v712
        %v714 = vmul.f32 %v663, 1.442695
        %v715 = vpow.pop %v714
        %v716 = vmul.f32 %v664, 1.442695
        %v717 = vpow.pop %v716
        %v718 = vmul.f32 %v665, 1.442695
        %v719 = vpow.pop %v718
        %v720 = vmul.f32 %v666, 1.442695
        %v721 = vpow.pop %v720
        %v722 = vmul.f32 %v667, 1.442695
        %v723 = vpow.pop %v722
        %v724 = vmul.f32 %v668, 1.442695
        %v725 = vpow.pop %v724
        %v726 = vmul.f32 %v669, 1.442695
        %v727 = vpow.pop %v726
        %v728 = vmul.f32 %v670, 1.442695
        %v729 = vpow.pop %v728
        %v730 = vmul.f32 %v671, 1.442695
        %v731 = vpow.pop %v730
        %v732 = vmul.f32 %v672, 1.442695
        %v733 = vpow.pop %v732
        %v734 = vmul.f32 %v673, 1.442695
        %v735 = vpow.pop %v734
        %v736 = vmul.f32 %v674, 1.442695
        %v737 = vpow.pop %v736
        %v738 = vmul.f32 %v675, 1.442695
        %v739 = vpow.pop %v738
        %v740 = vadd.f32 %v677, 1.0
        %v741 = vadd.f32 %v679, 1.0
        %v742 = vadd.f32 %v681, 1.0
        %v743 = vadd.f32 %v683, 1.0
        %v744 = vadd.f32 %v685, 1.0
        %v745 = vadd.f32 %v687, 1.0
        %v746 = vadd.f32 %v689, 1.0
        %v747 = vadd.f32 %v691, 1.0
        %v748 = vadd.f32 %v693, 1.0
        %v749 = vadd.f32 %v695, 1.0
        %v750 = vadd.f32 %v697, 1.0
        %v751 = vadd.f32 %v699, 1.0
        %v752 = vadd.f32 %v701, 1.0
        %v753 = vadd.f32 %v703, 1.0
        %v754 = vadd.f32 %v705, 1.0
        %v755 = vadd.f32 %v707, 1.0
        %v756 = vadd.f32 %v709, 1.0
        %v757 = vadd.f32 %v711, 1.0
        %v758 = vadd.f32 %v713, 1.0
        %v759 = vadd.f32 %v715, 1.0
        %v760 = vadd.f32 %v717, 1.0
        %v761 = vadd.f32 %v719, 1.0
        %v762 = vadd.f32 %v721, 1.0
        %v763 = vadd.f32 %v723, 1.0
        %v764 = vadd.f32 %v725, 1.0
        %v765 = vadd.f32 %v727, 1.0
        %v766 = vadd.f32 %v729, 1.0
        %v767 = vadd.f32 %v731, 1.0
        %v768 = vadd.f32 %v733, 1.0
        %v769 = vadd.f32 %v735, 1.0
        %v770 = vadd.f32 %v737, 1.0
        %v771 = vadd.f32 %v739, 1.0
        %v772 = vrcp.pop %v740
        %v773 = vrcp.pop %v741
        %v774 = vrcp.pop %v742
        %v775 = vrcp.pop %v743
        %v776 = vrcp.pop %v744
        %v777 = vrcp.pop %v745
        %v778 = vrcp.pop %v746
        %v779 = vrcp.pop %v747
        %v780 = vrcp.pop %v748
        %v781 = vrcp.pop %v749
        %v782 = vrcp.pop %v750
        %v783 = vrcp.pop %v751
        %v784 = vrcp.pop %v752
        %v785 = vrcp.pop %v753
        %v786 = vrcp.pop %v754
        %v787 = vrcp.pop %v755
        %v788 = vrcp.pop %v756
        %v789 = vrcp.pop %v757
        %v790 = vrcp.pop %v758
        %v791 = vrcp.pop %v759
        %v792 = vrcp.pop %v760
        %v793 = vrcp.pop %v761
        %v794 = vrcp.pop %v762
        %v795 = vrcp.pop %v763
        %v796 = vrcp.pop %v764
        %v797 = vrcp.pop %v765
        %v798 = vrcp.pop %v766
        %v799 = vrcp.pop %v767
        %v800 = vrcp.pop %v768
        %v801 = vrcp.pop %v769
        %v802 = vrcp.pop %v770
        %v803 = vrcp.pop %v771
        %v804 = vmul.f32 %v612, %v772
        %v805 = vmul.f32 %v613, %v773
        %v806 = vmul.f32 %v614, %v774
        %v807 = vmul.f32 %v615, %v775
        %v808 = vmul.f32 %v616, %v776
        %v809 = vmul.f32 %v617, %v777
        %v810 = vmul.f32 %v618, %v778
        %v811 = vmul.f32 %v619, %v779
        %v812 = vmul.f32 %v620, %v780
        %v813 = vmul.f32 %v621, %v781
        %v814 = vmul.f32 %v622, %v782
        %v815 = vmul.f32 %v623, %v783
        %v816 = vmul.f32 %v624, %v784
        %v817 = vmul.f32 %v625, %v785
        %v818 = vmul.f32 %v626, %v786
        %v819 = vmul.f32 %v627, %v787
        %v820 = vmul.f32 %v628, %v788
        %v821 = vmul.f32 %v629, %v789
        %v822 = vmul.f32 %v630, %v790
        %v823 = vmul.f32 %v631, %v791
        %v824 = vmul.f32 %v632, %v792
        %v825 = vmul.f32 %v633, %v793
        %v826 = vmul.f32 %v634, %v794
        %v827 = vmul.f32 %v635, %v795
        %v828 = vmul.f32 %v636, %v796
        %v829 = vmul.f32 %v637, %v797
        %v830 = vmul.f32 %v638, %v798
        %v831 = vmul.f32 %v639, %v799
        %v832 = vmul.f32 %v640, %v800
        %v833 = vmul.f32 %v641, %v801
        %v834 = vmul.f32 %v642, %v802
        %v835 = vmul.f32 %v643, %v803
        %836 = vst [vmem:[%s290] sm:$0xff] %v804
        %837 = vst [vmem:[%s290 + $0x8] sm:$0xff] %v805
        %838 = vst [vmem:[%s290 + $0x10] sm:$0xff] %v806
        %839 = vst [vmem:[%s290 + $0x18] sm:$0xff] %v807
        %840 = vst [vmem:[%s290 + $0x20] sm:$0xff] %v808
        %841 = vst [vmem:[%s290 + $0x28] sm:$0xff] %v809
        %842 = vst [vmem:[%s290 + $0x30] sm:$0xff] %v810
        %843 = vst [vmem:[%s290 + $0x38] sm:$0xff] %v811
        %844 = vst [vmem:[%s290 + $0x40] sm:$0xff] %v812
        %845 = vst [vmem:[%s290 + $0x48] sm:$0xff] %v813
        %846 = vst [vmem:[%s290 + $0x50] sm:$0xff] %v814
        %847 = vst [vmem:[%s290 + $0x58] sm:$0xff] %v815
        %848 = vst [vmem:[%s290 + $0x60] sm:$0xff] %v816
        %849 = vst [vmem:[%s290 + $0x68] sm:$0xff] %v817
        %850 = vst [vmem:[%s290 + $0x70] sm:$0xff] %v818
        %851 = vst [vmem:[%s290 + $0x78] sm:$0xff] %v819
        %852 = vst [vmem:[%s290 + $0x80] sm:$0xff] %v820
        %853 = vst [vmem:[%s290 + $0x88] sm:$0xff] %v821
        %854 = vst [vmem:[%s290 + $0x90] sm:$0xff] %v822
        %855 = vst [vmem:[%s290 + $0x98] sm:$0xff] %v823
        %856 = vst [vmem:[%s290 + $0xa0] sm:$0xff] %v824
        %857 = vst [vmem:[%s290 + $0xa8] sm:$0xff] %v825
        %858 = vst [vmem:[%s290 + $0xb0] sm:$0xff] %v826
        %859 = vst [vmem:[%s290 + $0xb8] sm:$0xff] %v827
        %860 = vst [vmem:[%s290 + $0xc0] sm:$0xff] %v828
        %861 = vst [vmem:[%s290 + $0xc8] sm:$0xff] %v829
        %862 = vst [vmem:[%s290 + $0xd0] sm:$0xff] %v830
        %863 = vst [vmem:[%s290 + $0xd8] sm:$0xff] %v831
        %864 = vst [vmem:[%s290 + $0xe0] sm:$0xff] %v832
        %865 = vst [vmem:[%s290 + $0xe8] sm:$0xff] %v833
        %866 = vst [vmem:[%s290 + $0xf0] sm:$0xff] %v834
        %867 = vst [vmem:[%s290 + $0xf8] sm:$0xff] %v835
        %s868 = sand.u32 %s149, 1
        %s869 = scalar_lea.sflag [#allocation4], %s868
        %s870 = sand.u32 %s149, 1
        %s871 = smul.addr %s870, 256
        %s872 = scalar_lea.vmem [#allocation10], %s871
        // Predicated region
        $region53: #{tpu_custom_call.1} parent=35 // pred_check
          %p873 = pneg %p159
        $region54: #{tpu_custom_call.1} parent=35 // pred_check_branch
          %875 = sbr.rel (%p873) target = $region56
        $region55: #{tpu_custom_call.1} parent=35 // pred_region
          %s876 = smul.u32 32, %s27
          %s878 = ssub.s32 4096, 4096
          %879 = vsyncadd %s869, %s878
          %s880 = sadd.s32 %s28, %s876
          %s881 = smul.addr %s880, 128
          %s882 = scalar_lea.hbm %s4, %s881
          %s883 = sshll.u32 %s872, 4
          %s884 = int_to_ptr.vmem [resolvable:$true] %s883
          %889 = dma.vmem_to_hbm [thread:$0]  %s884, 4096, %s882, %s869, 128, 128, 8
        $region56: #{tpu_custom_call.1} parent=35 // pred_fallthru
          _
      $region36: #{tpu_custom_call.1} parent=5 // pred_fallthru
        _
      %p890 = scmp.le.s32.totalorder 2, %s18
      // Predicated region
      $region57: #{tpu_custom_call.1} parent=5 // pred_check
        %p891 = pneg %p890
      $region58: #{tpu_custom_call.1} parent=5 // pred_check_branch
        %893 = sbr.rel (%p891) target = $region60
      $region59: #{tpu_custom_call.1} parent=5 // pred_region
        %s894 = ssub.s32 %s18, 2
        // Predicated region
        $region61: #{tpu_custom_call.1} parent=59 // pred_check
          %p895 = pneg %p165
        $region62: #{tpu_custom_call.1} parent=59 // pred_check_branch
          %897 = sbr.rel (%p895) target = $region64
        $region63: #{tpu_custom_call.1} parent=59 // pred_region
          %s898 = sand.u32 %s150, 1
          %s899 = scalar_lea.sflag [#allocation4], %s898
          %s900 = sand.u32 %s150, 1
          %s901 = smul.addr %s900, 256
          %s902 = scalar_lea.vmem [#allocation10], %s901
          %903 = dma.done %s899, 4096
        $region64: #{tpu_custom_call.1} parent=59 // pred_fallthru
          _
      $region60: #{tpu_custom_call.1} parent=5 // pred_fallthru
        _
    $region6: #{tpu_custom_call.1} parent=1 // loop_footer
      %s22 = sadd.s32 1, %s18
    $region7: #{tpu_custom_call.1} parent=1 // loop_footer_branch
      %17 = sbr.rel target = $region3
    $region8: #{tpu_custom_call.1} parent=1 // loop_exit
      _
    %904 = vsyncpa [#allocation3], 1
    %s905 = scalar_lea.sflag [#allocation3], 1
    %906 = vsyncpa %s905, 1
    %907 = vsyncpa [#allocation6], 1
    %908 = vsyncpa [#allocation9], 1
    %909 = vsyncpa [#allocation4], 1
    %s910 = scalar_lea.sflag [#allocation4], 1
    %911 = vsyncpa %s910, 1

</llo_original>
